<compile_context>
chip_gen: v6e
topology: v6e:2x2x1
jax: 0.10.0
libtpu: 0.0.40
codegen_flags: <defaults>
</compile_context>

<pallas_src>
import functools

import jax
import jax.numpy as jnp
from jax.experimental import pallas as pl
from jax.experimental.pallas import tpu as pltpu

BETA = 1.0          # TradesLoss(beta=1.0)
NUM_CLASSES = 10
N_PAD = 128         # padded class dim (lane-dense)


def _round_up(x, m):
    return (x + m - 1) // m * m


def _trades_kernel(xn_ref, xa_ref, w_ref, b_ref, y_ref, out_ref, acc_ref, *,
                   num_classes, beta):
    # grid = (batch_tiles, k_tiles); reduction axis (K) is last.
    k = pl.program_id(1)
    nk = pl.num_programs(1)
    tm = xn_ref.shape[0]

    @pl.when(k == 0)
    def _():
        # Seed the f32 logit accumulator with the bias (clean rows on top, adv below).
        acc_ref[...] = jnp.broadcast_to(b_ref[...].astype(jnp.float32), acc_ref.shape)

    w = w_ref[...]
    acc_ref[:tm, :] += jnp.dot(xn_ref[...], w, preferred_element_type=jnp.float32)
    acc_ref[tm:, :] += jnp.dot(xa_ref[...], w, preferred_element_type=jnp.float32)

    @pl.when(k == nk - 1)
    def _():
        n_pad = acc_ref.shape[-1]
        logits = acc_ref[...]                                            # (2*tm, n_pad) f32

        # Mask padded class columns -> probability exactly 0 for cols >= num_classes.
        col = jax.lax.broadcasted_iota(jnp.int32, logits.shape, 1)
        logits = jnp.where(col < num_classes, logits, -1e30)

        clean = logits[:tm]
        adv = logits[tm:]

        # softmax / log_softmax of clean logits (single exp pass).
        cmax = jnp.max(clean, axis=-1, keepdims=True)
        cshift = clean - cmax
        ce_exp = jnp.exp(cshift)
        csum = jnp.sum(ce_exp, axis=-1, keepdims=True)
        clogp = cshift - jnp.log(csum)
        p_clean = ce_exp / csum

        # log_softmax of adversarial logits.
        amax = jnp.max(adv, axis=-1, keepdims=True)
        ashift = adv - amax
        alogp = ashift - jnp.log(jnp.sum(jnp.exp(ashift), axis=-1, keepdims=True))

        # Labels: int32 column vector, -1 marks batch-padding rows.
        y_blk = y_ref[...]                                               # (tm, 1) int32
        row_valid = (y_blk >= 0).astype(jnp.float32)                     # (tm, 1)
        cls = jax.lax.broadcasted_iota(jnp.int32, (tm, n_pad), 1)
        yoh = (cls == y_blk).astype(jnp.float32)                         # in-kernel one-hot
        cls_valid = (cls < num_classes).astype(jnp.float32)

        # nn.CrossEntropyLoss (sum here; wrapper divides by B)
        ce = -jnp.sum(yoh * clogp * row_valid)
        # nn.KLDivLoss(reduction='batchmean') (sum here; wrapper divides by B)
        kl = jnp.sum(p_clean * (clogp - alogp) * cls_valid * row_valid)

        partial = ce + beta * kl
        # Lane-dense (1, 8, 128) unmasked store of the per-batch-tile partial.
        out_ref[...] = jnp.broadcast_to(partial, out_ref.shape)


@functools.partial(jax.jit, static_argnames=("beta",))
def trades_loss(x_nat, x_adv, y, w, b, *, beta=BETA):
    """x_nat/x_adv: [B, C, H, W], y: [B] int labels, w: [D, num_classes], b: [num_classes]."""
    bsz = x_nat.shape[0]
    xn = x_nat.reshape(bsz, -1)
    xa = x_adv.reshape(bsz, -1)
    d = xn.shape[1]
    n_cls = w.shape[1]
    assert n_cls <= N_PAD

    # ---- tile plan --------------------------------------------------------
    # Batch tile: fill the 128-row MXU when possible.
    tm = 128 if bsz >= 128 else _round_up(bsz, 8)
    b_pad = _round_up(bsz, tm)
    nb = b_pad // tm
    # K tile: largest of these dividing d_pad; at tm=128, tk=2048 f32 uses
    # ~6 MiB of VMEM with double buffering (far under the 32 MiB scoped limit).
    d_pad = _round_up(d, 128)
    tk = next(t for t in (2048, 1024, 512, 256, 128) if d_pad % t == 0)
    nk = d_pad // tk

    # ---- operand packing ---------------------------------------------------
    # No clean/adv stacking in HBM: each stays a separate input.  Zero padding
    # on batch and K is exact (padded rows give identical clean/adv logits ->
    # 0 KL, and are row-masked for CE).  Pads are no-ops when already aligned.
    xn = jnp.pad(xn, ((0, b_pad - bsz), (0, d_pad - d)))
    xa = jnp.pad(xa, ((0, b_pad - bsz), (0, d_pad - d)))
    wp = jnp.pad(w, ((0, d_pad - d), (0, N_PAD - n_cls)))
    bp = jnp.pad(jnp.reshape(b, (1, -1)).astype(jnp.float32),
                 ((0, 0), (0, N_PAD - n_cls)))
    yp = jnp.pad(y.astype(jnp.int32), (0, b_pad - bsz),
                 constant_values=-1).reshape(b_pad, 1)

    kernel = functools.partial(_trades_kernel, num_classes=n_cls, beta=float(beta))
    grid_spec = pltpu.PrefetchScalarGridSpec(
        num_scalar_prefetch=0,
        grid=(nb, nk),                                                  # reduction axis last
        in_specs=[
            pl.BlockSpec((tm, tk), lambda i, k: (i, k)),                # clean rows (dtype preserved)
            pl.BlockSpec((tm, tk), lambda i, k: (i, k)),                # adversarial rows
            pl.BlockSpec((tk, N_PAD), lambda i, k: (k, 0)),             # classifier weights
            pl.BlockSpec((1, N_PAD), lambda i, k: (0, 0)),              # bias
            pl.BlockSpec((tm, 1), lambda i, k: (i, 0)),                 # int32 labels
        ],
        out_specs=pl.BlockSpec((1, 8, 128), lambda i, k: (i, 0, 0)),    # per-batch-tile partial
        scratch_shapes=[pltpu.VMEM((2 * tm, N_PAD), jnp.float32)],      # logit accumulator
    )
    partials = pl.pallas_call(
        kernel,
        out_shape=jax.ShapeDtypeStruct((nb, 8, 128), jnp.float32),
        grid_spec=grid_spec,
        compiler_params=pltpu.CompilerParams(
            dimension_semantics=("parallel", "arbitrary"),
            vmem_limit_bytes=32 * 1024 * 1024),
    )(xn, xa, wp, bp, yp)

    # Per-batch-tile partial sums -> scalar loss (keeps the batch axis parallel).
    return jnp.sum(partials[:, 0, 0]) / bsz


def _reference(x_nat, x_adv, y, w, b, *, beta=BETA):
    """Pure-JAX reference matching the PyTorch semantics."""
    bsz = x_nat.shape[0]
    xn = x_nat.reshape(bsz, -1).astype(jnp.float32)
    xa = x_adv.reshape(bsz, -1).astype(jnp.float32)
    clean = xn @ w + b.reshape(1, -1)
    adv = xa @ w + b.reshape(1, -1)
    clogp = jax.nn.log_softmax(clean, axis=1)
    p_clean = jax.nn.softmax(clean, axis=1)
    alogp = jax.nn.log_softmax(adv, axis=1)
    ce = -jnp.mean(jnp.take_along_axis(clogp, y[:, None], axis=1))
    kl = jnp.sum(p_clean * (clogp - alogp)) / bsz
    return ce + beta * kl


if __name__ == "__main__":
    B, C, H, W = 2, 4, 16, 16
    D = C * H * W

    key = jax.random.PRNGKey(0)
    k_w, k_b, k_xn, k_eps, k_y = jax.random.split(key, 5)

    # Deterministic synthetic linear "model": logits = flatten(x) @ W + b.
    # TODO(synk): the PyTorch module accepts an arbitrary `model`; only a linear
    # classifier head is implemented in-kernel here.
    w = jax.random.normal(k_w, (D, NUM_CLASSES), dtype=jnp.float32) * 0.05
    b = jax.random.normal(k_b, (NUM_CLASSES,), dtype=jnp.float32) * 0.01

    x_nat = jax.random.normal(k_xn, (B, C, H, W), dtype=jnp.float32)
    x_adv = x_nat + 0.03 * jax.random.normal(k_eps, (B, C, H, W), dtype=jnp.float32)
    y = jax.random.randint(k_y, (B,), 0, NUM_CLASSES, dtype=jnp.int32)

    loss = jax.block_until_ready(trades_loss(x_nat, x_adv, y, w, b))
    ref = jax.block_until_ready(_reference(x_nat, x_adv, y, w, b))

    assert jnp.isfinite(loss), "kernel produced non-finite loss"
    assert jnp.allclose(loss, ref, rtol=2e-4, atol=2e-5), (loss, ref)
    print("KERNEL_OK")
</pallas_src>

<mosaic_0001>
module attributes {stable_mosaic.version = 11 : i64} {
  func.func @_trades_kernel(%arg0: i32, %arg1: i32, %arg2: memref<8x1024xf32, #tpu.memory_space<vmem>>, %arg3: memref<8x1024xf32, #tpu.memory_space<vmem>>, %arg4: memref<1024x128xf32, #tpu.memory_space<vmem>>, %arg5: memref<1x128xf32, #tpu.memory_space<vmem>>, %arg6: memref<8x1xi32, #tpu.memory_space<vmem>>, %arg7: memref<1x8x128xf32, #tpu.memory_space<vmem>>, %arg8: memref<16x128xf32, #tpu.memory_space<vmem>>) attributes {dimension_semantics = [#tpu.dimension_semantics<parallel>, #tpu.dimension_semantics<arbitrary>], iteration_bounds = array<i64: 1, 1>, scalar_prefetch = 0 : i64, scratch_operands = 1 : i64, tpu.core_type = #tpu.core_type<tc>, window_params = [{transform_indices = @transform_0, window_bounds = array<i64: 8, 1024>}, {transform_indices = @transform_1, window_bounds = array<i64: 8, 1024>}, {transform_indices = @transform_2, window_bounds = array<i64: 1024, 128>}, {pipeline_mode = #tpu.pipeline_mode<synchronous>, transform_indices = @transform_3, window_bounds = array<i64: 1, 128>}, {transform_indices = @transform_4, window_bounds = array<i64: 8, 1>}, {transform_indices = @transform_5, window_bounds = array<i64: 1, 8, 128>}]} {
    %c0_i32 = arith.constant 0 : i32
    %0 = arith.cmpi eq, %arg1, %c0_i32 : i32
    %1 = arith.extui %0 : i1 to i32
    %c0_i32_0 = arith.constant 0 : i32
    %2 = arith.cmpi ne, %1, %c0_i32_0 : i32
    scf.if %2 {
      %c0_16 = arith.constant 0 : index
      %c0_17 = arith.constant 0 : index
      %17 = vector.load %arg5[%c0_16, %c0_17] : memref<1x128xf32, #tpu.memory_space<vmem>>, vector<1x128xf32>
      %18 = vector.shape_cast %17 : vector<1x128xf32> to vector<1x128xf32>
      %19 = vector.broadcast %18 : vector<1x128xf32> to vector<16x128xf32>
      %c0_18 = arith.constant 0 : index
      %c0_19 = arith.constant 0 : index
      %20 = vector.load %arg8[%c0_18, %c0_19] : memref<16x128xf32, #tpu.memory_space<vmem>>, vector<16x128xf32>
      tpu.vector_store %arg8[%c0_18, %c0_19], %19 {strides = array<i32>} : memref<16x128xf32, #tpu.memory_space<vmem>>, vector<16x128xf32>,
    } else {
    }
    %c0 = arith.constant 0 : index
    %c0_1 = arith.constant 0 : index
    %3 = vector.load %arg4[%c0, %c0_1] : memref<1024x128xf32, #tpu.memory_space<vmem>>, vector<1024x128xf32>
    %c0_2 = arith.constant 0 : index
    %c0_3 = arith.constant 0 : index
    %4 = vector.load %arg8[%c0_2, %c0_3] : memref<16x128xf32, #tpu.memory_space<vmem>>, vector<8x128xf32>
    %c0_4 = arith.constant 0 : index
    %c0_5 = arith.constant 0 : index
    %5 = vector.load %arg2[%c0_4, %c0_5] : memref<8x1024xf32, #tpu.memory_space<vmem>>, vector<8x1024xf32>
    %cst = arith.constant dense<0.000000e+00> : vector<8x128xf32>
    %6 = tpu.matmul %5, %3, %cst {dimension_numbers = #tpu.dot_dimension_numbers<[1], [0], [0], [1], [0, 0, 1, 1], [], []>} : vector<8x1024xf32>, vector<1024x128xf32>, vector<8x128xf32> -> vector<8x128xf32>
    %7 = arith.addf %4, %6 : vector<8x128xf32>
    %c0_6 = arith.constant 0 : index
    %c0_7 = arith.constant 0 : index
    %8 = vector.load %arg8[%c0_6, %c0_7] : memref<16x128xf32, #tpu.memory_space<vmem>>, vector<8x128xf32>
    tpu.vector_store %arg8[%c0_6, %c0_7], %7 {strides = array<i32>} : memref<16x128xf32, #tpu.memory_space<vmem>>, vector<8x128xf32>,
    %c8 = arith.constant 8 : index
    %c0_8 = arith.constant 0 : index
    %9 = vector.load %arg8[%c8, %c0_8] : memref<16x128xf32, #tpu.memory_space<vmem>>, vector<8x128xf32>
    %c0_9 = arith.constant 0 : index
    %c0_10 = arith.constant 0 : index
    %10 = vector.load %arg3[%c0_9, %c0_10] : memref<8x1024xf32, #tpu.memory_space<vmem>>, vector<8x1024xf32>
    %cst_11 = arith.constant dense<0.000000e+00> : vector<8x128xf32>
    %11 = tpu.matmul %10, %3, %cst_11 {dimension_numbers = #tpu.dot_dimension_numbers<[1], [0], [0], [1], [0, 0, 1, 1], [], []>} : vector<8x1024xf32>, vector<1024x128xf32>, vector<8x128xf32> -> vector<8x128xf32>
    %12 = arith.addf %9, %11 : vector<8x128xf32>
    %c8_12 = arith.constant 8 : index
    %c0_13 = arith.constant 0 : index
    %13 = vector.load %arg8[%c8_12, %c0_13] : memref<16x128xf32, #tpu.memory_space<vmem>>, vector<8x128xf32>
    tpu.vector_store %arg8[%c8_12, %c0_13], %12 {strides = array<i32>} : memref<16x128xf32, #tpu.memory_space<vmem>>, vector<8x128xf32>,
    %c0_i32_14 = arith.constant 0 : i32
    %14 = arith.cmpi eq, %arg1, %c0_i32_14 : i32
    %15 = arith.extui %14 : i1 to i32
    %c0_i32_15 = arith.constant 0 : i32
    %16 = arith.cmpi ne, %15, %c0_i32_15 : i32
    scf.if %16 {
      %c0_16 = arith.constant 0 : index
      %c0_17 = arith.constant 0 : index
      %17 = vector.load %arg8[%c0_16, %c0_17] : memref<16x128xf32, #tpu.memory_space<vmem>>, vector<16x128xf32>
      %18 = tpu.iota {dimensions = array<i32: 1>} : vector<16x128xi32>
      %c10_i32 = arith.constant 10 : i32
      %19 = vector.broadcast %c10_i32 : i32 to vector<16x128xi32>
      %20 = arith.cmpi slt, %18, %19 : vector<16x128xi32>
      %cst_18 = arith.constant -1.000000e+30 : f32
      %21 = vector.broadcast %cst_18 : f32 to vector<16x128xf32>
      %22 = arith.select %20, %17, %21 : vector<16x128xi1>, vector<16x128xf32>
      %23 = vector.extract_strided_slice %22 {offsets = [0, 0], sizes = [8, 128], strides = [1, 1]} : vector<16x128xf32> to vector<8x128xf32>
      %24 = vector.extract_strided_slice %22 {offsets = [8, 0], sizes = [8, 128], strides = [1, 1]} : vector<16x128xf32> to vector<8x128xf32>
      %cst_19 = arith.constant dense<0xFF800000> : vector<8xf32>
      %25 = vector.multi_reduction <maximumf>, %23, %cst_19 [1] : vector<8x128xf32> to vector<8xf32>
      %26 = vector.shape_cast %25 : vector<8xf32> to vector<8x1xf32>
      %27 = vector.broadcast %26 : vector<8x1xf32> to vector<8x128xf32>
      %28 = arith.subf %23, %27 : vector<8x128xf32>
      %29 = math.exp %28 : vector<8x128xf32>
      %cst_20 = arith.constant dense<0.000000e+00> : vector<8xf32>
      %30 = vector.multi_reduction <add>, %29, %cst_20 [1] : vector<8x128xf32> to vector<8xf32>
      %31 = vector.shape_cast %30 : vector<8xf32> to vector<8x1xf32>
      %32 = math.log %31 : vector<8x1xf32>
      %33 = vector.broadcast %32 : vector<8x1xf32> to vector<8x128xf32>
      %34 = arith.subf %28, %33 : vector<8x128xf32>
      %35 = vector.broadcast %31 : vector<8x1xf32> to vector<8x128xf32>
      %36 = arith.divf %29, %35 : vector<8x128xf32>
      %cst_21 = arith.constant dense<0xFF800000> : vector<8xf32>
      %37 = vector.multi_reduction <maximumf>, %24, %cst_21 [1] : vector<8x128xf32> to vector<8xf32>
      %38 = vector.shape_cast %37 : vector<8xf32> to vector<8x1xf32>
      %39 = vector.broadcast %38 : vector<8x1xf32> to vector<8x128xf32>
      %40 = arith.subf %24, %39 : vector<8x128xf32>
      %41 = math.exp %40 : vector<8x128xf32>
      %cst_22 = arith.constant dense<0.000000e+00> : vector<8xf32>
      %42 = vector.multi_reduction <add>, %41, %cst_22 [1] : vector<8x128xf32> to vector<8xf32>
      %43 = vector.shape_cast %42 : vector<8xf32> to vector<8x1xf32>
      %44 = math.log %43 : vector<8x1xf32>
      %45 = vector.broadcast %44 : vector<8x1xf32> to vector<8x128xf32>
      %46 = arith.subf %40, %45 : vector<8x128xf32>
      %c0_23 = arith.constant 0 : index
      %c0_24 = arith.constant 0 : index
      %47 = vector.load %arg6[%c0_23, %c0_24] : memref<8x1xi32, #tpu.memory_space<vmem>>, vector<8x1xi32>
      %c0_i32_25 = arith.constant 0 : i32
      %48 = vector.broadcast %c0_i32_25 : i32 to vector<8x1xi32>
      %49 = arith.cmpi sge, %47, %48 : vector<8x1xi32>
      %50 = arith.extui %49 : vector<8x1xi1> to vector<8x1xi32>
      %51 = arith.sitofp %50 : vector<8x1xi32> to vector<8x1xf32>
      %52 = tpu.iota {dimensions = array<i32: 1>} : vector<8x128xi32>
      %53 = vector.broadcast %47 : vector<8x1xi32> to vector<8x128xi32>
      %54 = arith.cmpi eq, %52, %53 : vector<8x128xi32>
      %55 = arith.extui %54 : vector<8x128xi1> to vector<8x128xi32>
      %56 = arith.sitofp %55 : vector<8x128xi32> to vector<8x128xf32>
      %c10_i32_26 = arith.constant 10 : i32
      %57 = vector.broadcast %c10_i32_26 : i32 to vector<8x128xi32>
      %58 = arith.cmpi slt, %52, %57 : vector<8x128xi32>
      %59 = arith.extui %58 : vector<8x128xi1> to vector<8x128xi32>
      %60 = arith.sitofp %59 : vector<8x128xi32> to vector<8x128xf32>
      %61 = arith.mulf %56, %34 : vector<8x128xf32>
      %62 = vector.broadcast %51 : vector<8x1xf32> to vector<8x128xf32>
      %63 = arith.mulf %61, %62 : vector<8x128xf32>
      %64 = vector.shape_cast %63 : vector<8x128xf32> to vector<1x8x128xf32>
      %cst_27 = arith.constant dense<0.000000e+00> : vector<1xf32>
      %65 = vector.multi_reduction <add>, %64, %cst_27 [1, 2] : vector<1x8x128xf32> to vector<1xf32>
      %66 = vector.shape_cast %65 : vector<1xf32> to vector<1x1x1xf32>
      %67 = vector.extract %66[0, 0, 0] : f32 from vector<1x1x1xf32>
      %cst_28 = arith.constant 0.000000e+00 : f32
      %68 = arith.subf %cst_28, %67 : f32
      %69 = arith.subf %34, %46 : vector<8x128xf32>
      %70 = arith.mulf %36, %69 : vector<8x128xf32>
      %71 = arith.mulf %70, %60 : vector<8x128xf32>
      %72 = vector.broadcast %51 : vector<8x1xf32> to vector<8x128xf32>
      %73 = arith.mulf %71, %72 : vector<8x128xf32>
      %74 = vector.shape_cast %73 : vector<8x128xf32> to vector<1x8x128xf32>
      %cst_29 = arith.constant dense<0.000000e+00> : vector<1xf32>
      %75 = vector.multi_reduction <add>, %74, %cst_29 [1, 2] : vector<1x8x128xf32> to vector<1xf32>
      %76 = vector.shape_cast %75 : vector<1xf32> to vector<1x1x1xf32>
      %77 = vector.extract %76[0, 0, 0] : f32 from vector<1x1x1xf32>
      %cst_30 = arith.constant 1.000000e+00 : f32
      %78 = arith.mulf %cst_30, %77 : f32
      %79 = arith.addf %68, %78 : f32
      %80 = vector.broadcast %79 : f32 to vector<1x8x128xf32>
      %c0_31 = arith.constant 0 : index
      %c0_32 = arith.constant 0 : index
      %c0_33 = arith.constant 0 : index
      %81 = vector.load %arg7[%c0_31, %c0_32, %c0_33] : memref<1x8x128xf32, #tpu.memory_space<vmem>>, vector<1x8x128xf32>
      tpu.vector_store %arg7[%c0_31, %c0_32, %c0_33], %80 {strides = array<i32>} : memref<1x8x128xf32, #tpu.memory_space<vmem>>, vector<1x8x128xf32>,
    } else {
    }
    return
  }
  func.func @transform_0(%arg0: i32, %arg1: i32) -> (i32, i32) {
    %c0_i32 = arith.constant 0 : i32
    return %arg0, %arg1 : i32, i32
  }
  func.func @transform_1(%arg0: i32, %arg1: i32) -> (i32, i32) {
    %c0_i32 = arith.constant 0 : i32
    return %arg0, %arg1 : i32, i32
  }
  func.func @transform_2(%arg0: i32, %arg1: i32) -> (i32, i32) {
    %c0_i32 = arith.constant 0 : i32
    %c0_i32_0 = arith.constant 0 : i32
    return %arg1, %c0_i32 : i32, i32
  }
  func.func @transform_3(%arg0: i32, %arg1: i32) -> (i32, i32) {
    %c0_i32 = arith.constant 0 : i32
    %c0_i32_0 = arith.constant 0 : i32
    %c0_i32_1 = arith.constant 0 : i32
    return %c0_i32, %c0_i32_0 : i32, i32
  }
  func.func @transform_4(%arg0: i32, %arg1: i32) -> (i32, i32) {
    %c0_i32 = arith.constant 0 : i32
    %c0_i32_0 = arith.constant 0 : i32
    return %arg0, %c0_i32 : i32, i32
  }
  func.func @transform_5(%arg0: i32, %arg1: i32) -> (i32, i32, i32) {
    %c0_i32 = arith.constant 0 : i32
    %c0_i32_0 = arith.constant 0 : i32
    %c0_i32_1 = arith.constant 0 : i32
    return %arg0, %c0_i32, %c0_i32_0 : i32, i32, i32
  }
}

</mosaic_0001>

<llo_original>
// kernel: trades_loss.1
$region0: #{trades_loss.1}
  #allocation0 [shape = 'u32[]', space=smem, size = 0x4, offset = 0x4, fixed_abs, tag = 'smem constant byte address 0x4 - core index']
  #allocation1 [shape = 'u32[144,128]{1,0:T(1,128)}', space=vmem, size = 0x12000, scoped, tag = 'internal scratch']
  #allocation2 [shape = 'f32[16,128]{1,0:T(8,128)}', space=vmem, size = 0x2000, scoped, tag = 'scratch operand']
  %s0 = inlined_call_operand.vmem [shape: f32[8,1024], index: 0, kind: input, shape index: {}]
  %s1 = inlined_call_operand.vmem [shape: f32[8,1024], index: 1, kind: input, shape index: {}]
  %s2 = inlined_call_operand.vmem [shape: f32[1024,128], index: 2, kind: input, shape index: {}]
  %s3 = inlined_call_operand.vmem [shape: f32[1,128], index: 3, kind: input, shape index: {}]
  %s4 = inlined_call_operand.vmem [shape: s32[8,1], index: 4, kind: input, shape index: {}]
  %s5 = inlined_call_operand.vmem [shape: f32[1,8,128], index: 5, kind: output, shape index: {}]
  %s6 = sld [smem:[#allocation0]]
  $region38: #{trades_loss.1} parent=0
    _
  %s8 = ssub.s32 1, %s6
  %s9 = scalar_select 0, %s8, %s6
  // Predicated region
  $region2: #{trades_loss.1} parent=0 // pred_check
    _
  $region3: #{trades_loss.1} parent=0 // pred_check_branch
    %11 = sbr.rel (0) target = $region5
  $region4: #{trades_loss.1} parent=0 // pred_region
    _
  $region5: #{trades_loss.1} parent=0 // pred_fallthru
    _
  // Predicated region
  $region6: #{trades_loss.1} parent=0 // pred_check
    _
  $region7: #{trades_loss.1} parent=0 // pred_check_branch
    %13 = sbr.rel (0) target = $region9
  $region8: #{trades_loss.1} parent=0 // pred_region
    _
  $region9: #{trades_loss.1} parent=0 // pred_fallthru
    _
  // Predicated region
  $region10: #{trades_loss.1} parent=0 // pred_check
    _
  $region11: #{trades_loss.1} parent=0 // pred_check_branch
    %15 = sbr.rel (0) target = $region13
  $region12: #{trades_loss.1} parent=0 // pred_region
    _
  $region13: #{trades_loss.1} parent=0 // pred_fallthru
    _
  // Predicated region
  $region14: #{trades_loss.1} parent=0 // pred_check
    _
  $region15: #{trades_loss.1} parent=0 // pred_check_branch
    %17 = sbr.rel (0) target = $region17
  $region16: #{trades_loss.1} parent=0 // pred_region
    _
  $region17: #{trades_loss.1} parent=0 // pred_fallthru
    _
  // Predicated region
  $region18: #{trades_loss.1} parent=0 // pred_check
    _
  $region19: #{trades_loss.1} parent=0 // pred_check_branch
    %19 = sbr.rel (0) target = $region21
  $region20: #{trades_loss.1} parent=0 // pred_region
    _
  $region21: #{trades_loss.1} parent=0 // pred_fallthru
    _
  %p20 = scmp.eq.s32.totalorder 0, 0
  // Predicated region
  $region22: #{trades_loss.1} parent=0 // pred_check
    %p21 = pneg %p20
  $region23: #{trades_loss.1} parent=0 // pred_check_branch
    %23 = sbr.rel (%p21) target = $region25
  $region24: #{trades_loss.1} parent=0 // pred_region
    %v24 = vld [vmem:[%s3] sm:$0x1]
    %v26 = vlaneseq
    %v27 = vshrl.u32 %v26, 7
    %v28 = vsub.s32 0, %v27
    %v29 = vrot.slane %v24, %v28
    %31 = vst [vmem:[#allocation2] sm:$0xff] %v29
    %32 = vst [vmem:[#allocation2 + $0x8] sm:$0xff] %v29
  $region25: #{trades_loss.1} parent=0 // pred_fallthru
    _
  %v33 = vld [vmem:[%s2] sm:$0xff]
  %v34 = vld [vmem:[%s2 + $0x8] sm:$0xff]
  %v35 = vld [vmem:[%s2 + $0x10] sm:$0xff]
  %v36 = vld [vmem:[%s2 + $0x18] sm:$0xff]
  %v37 = vld [vmem:[%s2 + $0x20] sm:$0xff]
  %v38 = vld [vmem:[%s2 + $0x28] sm:$0xff]
  %v39 = vld [vmem:[%s2 + $0x30] sm:$0xff]
  %v40 = vld [vmem:[%s2 + $0x38] sm:$0xff]
  %v41 = vld [vmem:[%s2 + $0x40] sm:$0xff]
  %v42 = vld [vmem:[%s2 + $0x48] sm:$0xff]
  %v43 = vld [vmem:[%s2 + $0x50] sm:$0xff]
  %v44 = vld [vmem:[%s2 + $0x58] sm:$0xff]
  %v45 = vld [vmem:[%s2 + $0x60] sm:$0xff]
  %v46 = vld [vmem:[%s2 + $0x68] sm:$0xff]
  %v47 = vld [vmem:[%s2 + $0x70] sm:$0xff]
  %v48 = vld [vmem:[%s2 + $0x78] sm:$0xff]
  %v49 = vld [vmem:[%s2 + $0x80] sm:$0xff]
  %v50 = vld [vmem:[%s2 + $0x88] sm:$0xff]
  %v51 = vld [vmem:[%s2 + $0x90] sm:$0xff]
  %v52 = vld [vmem:[%s2 + $0x98] sm:$0xff]
  %v53 = vld [vmem:[%s2 + $0xa0] sm:$0xff]
  %v54 = vld [vmem:[%s2 + $0xa8] sm:$0xff]
  %v55 = vld [vmem:[%s2 + $0xb0] sm:$0xff]
  %v56 = vld [vmem:[%s2 + $0xb8] sm:$0xff]
  %v57 = vld [vmem:[%s2 + $0xc0] sm:$0xff]
  %v58 = vld [vmem:[%s2 + $0xc8] sm:$0xff]
  %v59 = vld [vmem:[%s2 + $0xd0] sm:$0xff]
  %v60 = vld [vmem:[%s2 + $0xd8] sm:$0xff]
  %v61 = vld [vmem:[%s2 + $0xe0] sm:$0xff]
  %v62 = vld [vmem:[%s2 + $0xe8] sm:$0xff]
  %v63 = vld [vmem:[%s2 + $0xf0] sm:$0xff]
  %v64 = vld [vmem:[%s2 + $0xf8] sm:$0xff]
  %v65 = vld [vmem:[%s2 + $0x100] sm:$0xff]
  %v66 = vld [vmem:[%s2 + $0x108] sm:$0xff]
  %v67 = vld [vmem:[%s2 + $0x110] sm:$0xff]
  %v68 = vld [vmem:[%s2 + $0x118] sm:$0xff]
  %v69 = vld [vmem:[%s2 + $0x120] sm:$0xff]
  %v70 = vld [vmem:[%s2 + $0x128] sm:$0xff]
  %v71 = vld [vmem:[%s2 + $0x130] sm:$0xff]
  %v72 = vld [vmem:[%s2 + $0x138] sm:$0xff]
  %v73 = vld [vmem:[%s2 + $0x140] sm:$0xff]
  %v74 = vld [vmem:[%s2 + $0x148] sm:$0xff]
  %v75 = vld [vmem:[%s2 + $0x150] sm:$0xff]
  %v76 = vld [vmem:[%s2 + $0x158] sm:$0xff]
  %v77 = vld [vmem:[%s2 + $0x160] sm:$0xff]
  %v78 = vld [vmem:[%s2 + $0x168] sm:$0xff]
  %v79 = vld [vmem:[%s2 + $0x170] sm:$0xff]
  %v80 = vld [vmem:[%s2 + $0x178] sm:$0xff]
  %v81 = vld [vmem:[%s2 + $0x180] sm:$0xff]
  %v82 = vld [vmem:[%s2 + $0x188] sm:$0xff]
  %v83 = vld [vmem:[%s2 + $0x190] sm:$0xff]
  %v84 = vld [vmem:[%s2 + $0x198] sm:$0xff]
  %v85 = vld [vmem:[%s2 + $0x1a0] sm:$0xff]
  %v86 = vld [vmem:[%s2 + $0x1a8] sm:$0xff]
  %v87 = vld [vmem:[%s2 + $0x1b0] sm:$0xff]
  %v88 = vld [vmem:[%s2 + $0x1b8] sm:$0xff]
  %v89 = vld [vmem:[%s2 + $0x1c0] sm:$0xff]
  %v90 = vld [vmem:[%s2 + $0x1c8] sm:$0xff]
  %v91 = vld [vmem:[%s2 + $0x1d0] sm:$0xff]
  %v92 = vld [vmem:[%s2 + $0x1d8] sm:$0xff]
  %v93 = vld [vmem:[%s2 + $0x1e0] sm:$0xff]
  %v94 = vld [vmem:[%s2 + $0x1e8] sm:$0xff]
  %v95 = vld [vmem:[%s2 + $0x1f0] sm:$0xff]
  %v96 = vld [vmem:[%s2 + $0x1f8] sm:$0xff]
  %v97 = vld [vmem:[%s2 + $0x200] sm:$0xff]
  %v98 = vld [vmem:[%s2 + $0x208] sm:$0xff]
  %v99 = vld [vmem:[%s2 + $0x210] sm:$0xff]
  %v100 = vld [vmem:[%s2 + $0x218] sm:$0xff]
  %v101 = vld [vmem:[%s2 + $0x220] sm:$0xff]
  %v102 = vld [vmem:[%s2 + $0x228] sm:$0xff]
  %v103 = vld [vmem:[%s2 + $0x230] sm:$0xff]
  %v104 = vld [vmem:[%s2 + $0x238] sm:$0xff]
  %v105 = vld [vmem:[%s2 + $0x240] sm:$0xff]
  %v106 = vld [vmem:[%s2 + $0x248] sm:$0xff]
  %v107 = vld [vmem:[%s2 + $0x250] sm:$0xff]
  %v108 = vld [vmem:[%s2 + $0x258] sm:$0xff]
  %v109 = vld [vmem:[%s2 + $0x260] sm:$0xff]
  %v110 = vld [vmem:[%s2 + $0x268] sm:$0xff]
  %v111 = vld [vmem:[%s2 + $0x270] sm:$0xff]
  %v112 = vld [vmem:[%s2 + $0x278] sm:$0xff]
  %v113 = vld [vmem:[%s2 + $0x280] sm:$0xff]
  %v114 = vld [vmem:[%s2 + $0x288] sm:$0xff]
  %v115 = vld [vmem:[%s2 + $0x290] sm:$0xff]
  %v116 = vld [vmem:[%s2 + $0x298] sm:$0xff]
  %v117 = vld [vmem:[%s2 + $0x2a0] sm:$0xff]
  %v118 = vld [vmem:[%s2 + $0x2a8] sm:$0xff]
  %v119 = vld [vmem:[%s2 + $0x2b0] sm:$0xff]
  %v120 = vld [vmem:[%s2 + $0x2b8] sm:$0xff]
  %v121 = vld [vmem:[%s2 + $0x2c0] sm:$0xff]
  %v122 = vld [vmem:[%s2 + $0x2c8] sm:$0xff]
  %v123 = vld [vmem:[%s2 + $0x2d0] sm:$0xff]
  %v124 = vld [vmem:[%s2 + $0x2d8] sm:$0xff]
  %v125 = vld [vmem:[%s2 + $0x2e0] sm:$0xff]
  %v126 = vld [vmem:[%s2 + $0x2e8] sm:$0xff]
  %v127 = vld [vmem:[%s2 + $0x2f0] sm:$0xff]
  %v128 = vld [vmem:[%s2 + $0x2f8] sm:$0xff]
  %v129 = vld [vmem:[%s2 + $0x300] sm:$0xff]
  %v130 = vld [vmem:[%s2 + $0x308] sm:$0xff]
  %v131 = vld [vmem:[%s2 + $0x310] sm:$0xff]
  %v132 = vld [vmem:[%s2 + $0x318] sm:$0xff]
  %v133 = vld [vmem:[%s2 + $0x320] sm:$0xff]
  %v134 = vld [vmem:[%s2 + $0x328] sm:$0xff]
  %v135 = vld [vmem:[%s2 + $0x330] sm:$0xff]
  %v136 = vld [vmem:[%s2 + $0x338] sm:$0xff]
  %v137 = vld [vmem:[%s2 + $0x340] sm:$0xff]
  %v138 = vld [vmem:[%s2 + $0x348] sm:$0xff]
  %v139 = vld [vmem:[%s2 + $0x350] sm:$0xff]
  %v140 = vld [vmem:[%s2 + $0x358] sm:$0xff]
  %v141 = vld [vmem:[%s2 + $0x360] sm:$0xff]
  %v142 = vld [vmem:[%s2 + $0x368] sm:$0xff]
  %v143 = vld [vmem:[%s2 + $0x370] sm:$0xff]
  %v144 = vld [vmem:[%s2 + $0x378] sm:$0xff]
  %v145 = vld [vmem:[%s2 + $0x380] sm:$0xff]
  %v146 = vld [vmem:[%s2 + $0x388] sm:$0xff]
  %v147 = vld [vmem:[%s2 + $0x390] sm:$0xff]
  %v148 = vld [vmem:[%s2 + $0x398] sm:$0xff]
  %v149 = vld [vmem:[%s2 + $0x3a0] sm:$0xff]
  %v150 = vld [vmem:[%s2 + $0x3a8] sm:$0xff]
  %v151 = vld [vmem:[%s2 + $0x3b0] sm:$0xff]
  %v152 = vld [vmem:[%s2 + $0x3b8] sm:$0xff]
  %v153 = vld [vmem:[%s2 + $0x3c0] sm:$0xff]
  %v154 = vld [vmem:[%s2 + $0x3c8] sm:$0xff]
  %v155 = vld [vmem:[%s2 + $0x3d0] sm:$0xff]
  %v156 = vld [vmem:[%s2 + $0x3d8] sm:$0xff]
  %v157 = vld [vmem:[%s2 + $0x3e0] sm:$0xff]
  %v158 = vld [vmem:[%s2 + $0x3e8] sm:$0xff]
  %v159 = vld [vmem:[%s2 + $0x3f0] sm:$0xff]
  %v160 = vld [vmem:[%s2 + $0x3f8] sm:$0xff]
  %v161 = vld [vmem:[#allocation2] sm:$0xff]
  %v162 = vld [vmem:[%s0] sm:$0xff]
  %v163 = vld [vmem:[%s0 + $0x8] sm:$0xff]
  %v164 = vld [vmem:[%s0 + $0x10] sm:$0xff]
  %v165 = vld [vmem:[%s0 + $0x18] sm:$0xff]
  %v166 = vld [vmem:[%s0 + $0x20] sm:$0xff]
  %v167 = vld [vmem:[%s0 + $0x28] sm:$0xff]
  %v168 = vld [vmem:[%s0 + $0x30] sm:$0xff]
  %v169 = vld [vmem:[%s0 + $0x38] sm:$0xff]
  %170 = vmatprep.subr.mxu0 0.0
  %171 = vmatpush1.msra.mxu0 %v48
  %172 = vmatprep.subr.mxu0 0.0
  %173 = vmatpush1.msra.mxu0 %v47
  %174 = vmatprep.subr.mxu0 0.0
  %175 = vmatpush1.msra.mxu0 %v46
  %176 = vmatprep.subr.mxu0 0.0
  %177 = vmatpush1.msra.mxu0 %v45
  %178 = vmatprep.subr.mxu0 0.0
  %179 = vmatpush1.msra.mxu0 %v44
  %180 = vmatprep.subr.mxu0 0.0
  %181 = vmatpush1.msra.mxu0 %v43
  %182 = vmatprep.subr.mxu0 0.0
  %183 = vmatpush1.msra.mxu0 %v42
  %184 = vmatprep.subr.mxu0 0.0
  %185 = vmatpush1.msra.mxu0 %v41
  %186 = vmatprep.subr.mxu0 0.0
  %187 = vmatpush1.msra.mxu0 %v40
  %188 = vmatprep.subr.mxu0 0.0
  %189 = vmatpush1.msra.mxu0 %v39
  %190 = vmatprep.subr.mxu0 0.0
  %191 = vmatpush1.msra.mxu0 %v38
  %192 = vmatprep.subr.mxu0 0.0
  %193 = vmatpush1.msra.mxu0 %v37
  %194 = vmatprep.subr.mxu0 0.0
  %195 = vmatpush1.msra.mxu0 %v36
  %196 = vmatprep.subr.mxu0 0.0
  %197 = vmatpush1.msra.mxu0 %v35
  %198 = vmatprep.subr.mxu0 0.0
  %199 = vmatpush1.msra.mxu0 %v34
  %200 = vmatprep.subr.mxu0 0.0
  %201 = vmatpush1.msra.mxu0 %v33
  %202 = vmatprep.subr.mxu0 0.0
  %203 = vmatpush2.msra.mxu0 %v64
  %204 = vmatprep.subr.mxu0 0.0
  %205 = vmatpush2.msra.mxu0 %v63
  %206 = vmatprep.subr.mxu0 0.0
  %207 = vmatpush2.msra.mxu0 %v62
  %208 = vmatprep.subr.mxu0 0.0
  %209 = vmatpush2.msra.mxu0 %v61
  %210 = vmatprep.subr.mxu0 0.0
  %211 = vmatpush2.msra.mxu0 %v60
  %212 = vmatprep.subr.mxu0 0.0
  %213 = vmatpush2.msra.mxu0 %v59
  %214 = vmatprep.subr.mxu0 0.0
  %215 = vmatpush2.msra.mxu0 %v58
  %216 = vmatprep.subr.mxu0 0.0
  %217 = vmatpush2.msra.mxu0 %v57
  %218 = vmatprep.subr.mxu0 0.0
  %219 = vmatpush2.msra.mxu0 %v56
  %220 = vmatprep.subr.mxu0 0.0
  %221 = vmatpush2.msra.mxu0 %v55
  %222 = vmatprep.subr.mxu0 0.0
  %223 = vmatpush2.msra.mxu0 %v54
  %224 = vmatprep.subr.mxu0 0.0
  %225 = vmatpush2.msra.mxu0 %v53
  %226 = vmatprep.subr.mxu0 0.0
  %227 = vmatpush2.msra.mxu0 %v52
  %228 = vmatprep.subr.mxu0 0.0
  %229 = vmatpush2.msra.mxu0 %v51
  %230 = vmatprep.subr.mxu0 0.0
  %231 = vmatpush2.msra.mxu0 %v50
  %232 = vmatprep.subr.mxu0 0.0
  %233 = vmatpush2.msra.mxu0 %v49
  %234 = vmatprep.mubr.f32.mxu0 %v163
  %235 = vmatmul.mubr.f32.gmra.mxu0 %v162
  %v236 = vpop.f32.mrf.mxu0
  %v237 = vadd.f32 0.0, %v236
  %v238 = vpop.f32.mrf.mxu0
  %239 = vdwg.mxu0
  %240 = vmatprep.subr.mxu0 0.0
  %241 = vmatpush1.msra.mxu0 %v80
  %242 = vmatprep.subr.mxu0 0.0
  %243 = vmatpush1.msra.mxu0 %v79
  %244 = vmatprep.subr.mxu0 0.0
  %245 = vmatpush1.msra.mxu0 %v78
  %246 = vmatprep.subr.mxu0 0.0
  %247 = vmatpush1.msra.mxu0 %v77
  %248 = vmatprep.subr.mxu0 0.0
  %249 = vmatpush1.msra.mxu0 %v76
  %250 = vmatprep.subr.mxu0 0.0
  %251 = vmatpush1.msra.mxu0 %v75
  %252 = vmatprep.subr.mxu0 0.0
  %253 = vmatpush1.msra.mxu0 %v74
  %254 = vmatprep.subr.mxu0 0.0
  %255 = vmatpush1.msra.mxu0 %v73
  %256 = vmatprep.subr.mxu0 0.0
  %257 = vmatpush1.msra.mxu0 %v72
  %258 = vmatprep.subr.mxu0 0.0
  %259 = vmatpush1.msra.mxu0 %v71
  %260 = vmatprep.subr.mxu0 0.0
  %261 = vmatpush1.msra.mxu0 %v70
  %262 = vmatprep.subr.mxu0 0.0
  %263 = vmatpush1.msra.mxu0 %v69
  %264 = vmatprep.subr.mxu0 0.0
  %265 = vmatpush1.msra.mxu0 %v68
  %266 = vmatprep.subr.mxu0 0.0
  %267 = vmatpush1.msra.mxu0 %v67
  %268 = vmatprep.subr.mxu0 0.0
  %269 = vmatpush1.msra.mxu0 %v66
  %270 = vmatprep.subr.mxu0 0.0
  %271 = vmatpush1.msra.mxu0 %v65
  %272 = vmatprep.subr.mxu0 0.0
  %273 = vmatpush2.msra.mxu0 %v96
  %274 = vmatprep.subr.mxu0 0.0
  %275 = vmatpush2.msra.mxu0 %v95
  %276 = vmatprep.subr.mxu0 0.0
  %277 = vmatpush2.msra.mxu0 %v94
  %278 = vmatprep.subr.mxu0 0.0
  %279 = vmatpush2.msra.mxu0 %v93
  %280 = vmatprep.subr.mxu0 0.0
  %281 = vmatpush2.msra.mxu0 %v92
  %282 = vmatprep.subr.mxu0 0.0
  %283 = vmatpush2.msra.mxu0 %v91
  %284 = vmatprep.subr.mxu0 0.0
  %285 = vmatpush2.msra.mxu0 %v90
  %286 = vmatprep.subr.mxu0 0.0
  %287 = vmatpush2.msra.mxu0 %v89
  %288 = vmatprep.subr.mxu0 0.0
  %289 = vmatpush2.msra.mxu0 %v88
  %290 = vmatprep.subr.mxu0 0.0
  %291 = vmatpush2.msra.mxu0 %v87
  %292 = vmatprep.subr.mxu0 0.0
  %293 = vmatpush2.msra.mxu0 %v86
  %294 = vmatprep.subr.mxu0 0.0
  %295 = vmatpush2.msra.mxu0 %v85
  %296 = vmatprep.subr.mxu0 0.0
  %297 = vmatpush2.msra.mxu0 %v84
  %298 = vmatprep.subr.mxu0 0.0
  %299 = vmatpush2.msra.mxu0 %v83
  %300 = vmatprep.subr.mxu0 0.0
  %301 = vmatpush2.msra.mxu0 %v82
  %302 = vmatprep.subr.mxu0 0.0
  %303 = vmatpush2.msra.mxu0 %v81
  %304 = vmatprep.mubr.f32.mxu0 %v165
  %305 = vmatmul.mubr.f32.gmra.mxu0 %v164
  %v306 = vpop.f32.mrf.mxu0
  %v307 = vadd.f32 %v237, %v306
  %v308 = vpop.f32.mrf.mxu0
  %309 = vdwg.mxu0
  %310 = vmatprep.subr.mxu0 0.0
  %311 = vmatpush1.msra.mxu0 %v112
  %312 = vmatprep.subr.mxu0 0.0
  %313 = vmatpush1.msra.mxu0 %v111
  %314 = vmatprep.subr.mxu0 0.0
  %315 = vmatpush1.msra.mxu0 %v110
  %316 = vmatprep.subr.mxu0 0.0
  %317 = vmatpush1.msra.mxu0 %v109
  %318 = vmatprep.subr.mxu0 0.0
  %319 = vmatpush1.msra.mxu0 %v108
  %320 = vmatprep.subr.mxu0 0.0
  %321 = vmatpush1.msra.mxu0 %v107
  %322 = vmatprep.subr.mxu0 0.0
  %323 = vmatpush1.msra.mxu0 %v106
  %324 = vmatprep.subr.mxu0 0.0
  %325 = vmatpush1.msra.mxu0 %v105
  %326 = vmatprep.subr.mxu0 0.0
  %327 = vmatpush1.msra.mxu0 %v104
  %328 = vmatprep.subr.mxu0 0.0
  %329 = vmatpush1.msra.mxu0 %v103
  %330 = vmatprep.subr.mxu0 0.0
  %331 = vmatpush1.msra.mxu0 %v102
  %332 = vmatprep.subr.mxu0 0.0
  %333 = vmatpush1.msra.mxu0 %v101
  %334 = vmatprep.subr.mxu0 0.0
  %335 = vmatpush1.msra.mxu0 %v100
  %336 = vmatprep.subr.mxu0 0.0
  %337 = vmatpush1.msra.mxu0 %v99
  %338 = vmatprep.subr.mxu0 0.0
  %339 = vmatpush1.msra.mxu0 %v98
  %340 = vmatprep.subr.mxu0 0.0
  %341 = vmatpush1.msra.mxu0 %v97
  %342 = vmatprep.subr.mxu0 0.0
  %343 = vmatpush2.msra.mxu0 %v128
  %344 = vmatprep.subr.mxu0 0.0
  %345 = vmatpush2.msra.mxu0 %v127
  %346 = vmatprep.subr.mxu0 0.0
  %347 = vmatpush2.msra.mxu0 %v126
  %348 = vmatprep.subr.mxu0 0.0
  %349 = vmatpush2.msra.mxu0 %v125
  %350 = vmatprep.subr.mxu0 0.0
  %351 = vmatpush2.msra.mxu0 %v124
  %352 = vmatprep.subr.mxu0 0.0
  %353 = vmatpush2.msra.mxu0 %v123
  %354 = vmatprep.subr.mxu0 0.0
  %355 = vmatpush2.msra.mxu0 %v122
  %356 = vmatprep.subr.mxu0 0.0
  %357 = vmatpush2.msra.mxu0 %v121
  %358 = vmatprep.subr.mxu0 0.0
  %359 = vmatpush2.msra.mxu0 %v120
  %360 = vmatprep.subr.mxu0 0.0
  %361 = vmatpush2.msra.mxu0 %v119
  %362 = vmatprep.subr.mxu0 0.0
  %363 = vmatpush2.msra.mxu0 %v118
  %364 = vmatprep.subr.mxu0 0.0
  %365 = vmatpush2.msra.mxu0 %v117
  %366 = vmatprep.subr.mxu0 0.0
  %367 = vmatpush2.msra.mxu0 %v116
  %368 = vmatprep.subr.mxu0 0.0
  %369 = vmatpush2.msra.mxu0 %v115
  %370 = vmatprep.subr.mxu0 0.0
  %371 = vmatpush2.msra.mxu0 %v114
  %372 = vmatprep.subr.mxu0 0.0
  %373 = vmatpush2.msra.mxu0 %v113
  %374 = vmatprep.mubr.f32.mxu0 %v167
  %375 = vmatmul.mubr.f32.gmra.mxu0 %v166
  %v376 = vpop.f32.mrf.mxu0
  %v377 = vadd.f32 %v307, %v376
  %v378 = vpop.f32.mrf.mxu0
  %379 = vdwg.mxu0
  %380 = vmatprep.subr.mxu0 0.0
  %381 = vmatpush1.msra.mxu0 %v144
  %382 = vmatprep.subr.mxu0 0.0
  %383 = vmatpush1.msra.mxu0 %v143
  %384 = vmatprep.subr.mxu0 0.0
  %385 = vmatpush1.msra.mxu0 %v142
  %386 = vmatprep.subr.mxu0 0.0
  %387 = vmatpush1.msra.mxu0 %v141
  %388 = vmatprep.subr.mxu0 0.0
  %389 = vmatpush1.msra.mxu0 %v140
  %390 = vmatprep.subr.mxu0 0.0
  %391 = vmatpush1.msra.mxu0 %v139
  %392 = vmatprep.subr.mxu0 0.0
  %393 = vmatpush1.msra.mxu0 %v138
  %394 = vmatprep.subr.mxu0 0.0
  %395 = vmatpush1.msra.mxu0 %v137
  %396 = vmatprep.subr.mxu0 0.0
  %397 = vmatpush1.msra.mxu0 %v136
  %398 = vmatprep.subr.mxu0 0.0
  %399 = vmatpush1.msra.mxu0 %v135
  %400 = vmatprep.subr.mxu0 0.0
  %401 = vmatpush1.msra.mxu0 %v134
  %402 = vmatprep.subr.mxu0 0.0
  %403 = vmatpush1.msra.mxu0 %v133
  %404 = vmatprep.subr.mxu0 0.0
  %405 = vmatpush1.msra.mxu0 %v132
  %406 = vmatprep.subr.mxu0 0.0
  %407 = vmatpush1.msra.mxu0 %v131
  %408 = vmatprep.subr.mxu0 0.0
  %409 = vmatpush1.msra.mxu0 %v130
  %410 = vmatprep.subr.mxu0 0.0
  %411 = vmatpush1.msra.mxu0 %v129
  %412 = vmatprep.subr.mxu0 0.0
  %413 = vmatpush2.msra.mxu0 %v160
  %414 = vmatprep.subr.mxu0 0.0
  %415 = vmatpush2.msra.mxu0 %v159
  %416 = vmatprep.subr.mxu0 0.0
  %417 = vmatpush2.msra.mxu0 %v158
  %418 = vmatprep.subr.mxu0 0.0
  %419 = vmatpush2.msra.mxu0 %v157
  %420 = vmatprep.subr.mxu0 0.0
  %421 = vmatpush2.msra.mxu0 %v156
  %422 = vmatprep.subr.mxu0 0.0
  %423 = vmatpush2.msra.mxu0 %v155
  %424 = vmatprep.subr.mxu0 0.0
  %425 = vmatpush2.msra.mxu0 %v154
  %426 = vmatprep.subr.mxu0 0.0
  %427 = vmatpush2.msra.mxu0 %v153
  %428 = vmatprep.subr.mxu0 0.0
  %429 = vmatpush2.msra.mxu0 %v152
  %430 = vmatprep.subr.mxu0 0.0
  %431 = vmatpush2.msra.mxu0 %v151
  %432 = vmatprep.subr.mxu0 0.0
  %433 = vmatpush2.msra.mxu0 %v150
  %434 = vmatprep.subr.mxu0 0.0
  %435 = vmatpush2.msra.mxu0 %v149
  %436 = vmatprep.subr.mxu0 0.0
  %437 = vmatpush2.msra.mxu0 %v148
  %438 = vmatprep.subr.mxu0 0.0
  %439 = vmatpush2.msra.mxu0 %v147
  %440 = vmatprep.subr.mxu0 0.0
  %441 = vmatpush2.msra.mxu0 %v146
  %442 = vmatprep.subr.mxu0 0.0
  %443 = vmatpush2.msra.mxu0 %v145
  %444 = vmatprep.mubr.f32.mxu0 %v169
  %445 = vmatmul.mubr.f32.gmra.mxu0 %v168
  %v446 = vpop.f32.mrf.mxu0
  %v447 = vadd.f32 %v377, %v446
  %v448 = vpop.f32.mrf.mxu0
  %449 = vdwg.mxu0
  %v450 = vadd.f32 %v161, %v447
  %451 = vst [vmem:[#allocation2] sm:$0xff] %v450
  %v452 = vld [vmem:[#allocation2 + $0x8] sm:$0xff]
  %v453 = vld [vmem:[%s1] sm:$0xff]
  %v454 = vld [vmem:[%s1 + $0x8] sm:$0xff]
  %v455 = vld [vmem:[%s1 + $0x10] sm:$0xff]
  %v456 = vld [vmem:[%s1 + $0x18] sm:$0xff]
  %v457 = vld [vmem:[%s1 + $0x20] sm:$0xff]
  %v458 = vld [vmem:[%s1 + $0x28] sm:$0xff]
  %v459 = vld [vmem:[%s1 + $0x30] sm:$0xff]
  %v460 = vld [vmem:[%s1 + $0x38] sm:$0xff]
  %461 = vmatprep.subr.mxu0 0.0
  %462 = vmatpush1.msra.mxu0 %v48
  %463 = vmatprep.subr.mxu0 0.0
  %464 = vmatpush1.msra.mxu0 %v47
  %465 = vmatprep.subr.mxu0 0.0
  %466 = vmatpush1.msra.mxu0 %v46
  %467 = vmatprep.subr.mxu0 0.0
  %468 = vmatpush1.msra.mxu0 %v45
  %469 = vmatprep.subr.mxu0 0.0
  %470 = vmatpush1.msra.mxu0 %v44
  %471 = vmatprep.subr.mxu0 0.0
  %472 = vmatpush1.msra.mxu0 %v43
  %473 = vmatprep.subr.mxu0 0.0
  %474 = vmatpush1.msra.mxu0 %v42
  %475 = vmatprep.subr.mxu0 0.0
  %476 = vmatpush1.msra.mxu0 %v41
  %477 = vmatprep.subr.mxu0 0.0
  %478 = vmatpush1.msra.mxu0 %v40
  %479 = vmatprep.subr.mxu0 0.0
  %480 = vmatpush1.msra.mxu0 %v39
  %481 = vmatprep.subr.mxu0 0.0
  %482 = vmatpush1.msra.mxu0 %v38
  %483 = vmatprep.subr.mxu0 0.0
  %484 = vmatpush1.msra.mxu0 %v37
  %485 = vmatprep.subr.mxu0 0.0
  %486 = vmatpush1.msra.mxu0 %v36
  %487 = vmatprep.subr.mxu0 0.0
  %488 = vmatpush1.msra.mxu0 %v35
  %489 = vmatprep.subr.mxu0 0.0
  %490 = vmatpush1.msra.mxu0 %v34
  %491 = vmatprep.subr.mxu0 0.0
  %492 = vmatpush1.msra.mxu0 %v33
  %493 = vmatprep.subr.mxu0 0.0
  %494 = vmatpush2.msra.mxu0 %v64
  %495 = vmatprep.subr.mxu0 0.0
  %496 = vmatpush2.msra.mxu0 %v63
  %497 = vmatprep.subr.mxu0 0.0
  %498 = vmatpush2.msra.mxu0 %v62
  %499 = vmatprep.subr.mxu0 0.0
  %500 = vmatpush2.msra.mxu0 %v61
  %501 = vmatprep.subr.mxu0 0.0
  %502 = vmatpush2.msra.mxu0 %v60
  %503 = vmatprep.subr.mxu0 0.0
  %504 = vmatpush2.msra.mxu0 %v59
  %505 = vmatprep.subr.mxu0 0.0
  %506 = vmatpush2.msra.mxu0 %v58
  %507 = vmatprep.subr.mxu0 0.0
  %508 = vmatpush2.msra.mxu0 %v57
  %509 = vmatprep.subr.mxu0 0.0
  %510 = vmatpush2.msra.mxu0 %v56
  %511 = vmatprep.subr.mxu0 0.0
  %512 = vmatpush2.msra.mxu0 %v55
  %513 = vmatprep.subr.mxu0 0.0
  %514 = vmatpush2.msra.mxu0 %v54
  %515 = vmatprep.subr.mxu0 0.0
  %516 = vmatpush2.msra.mxu0 %v53
  %517 = vmatprep.subr.mxu0 0.0
  %518 = vmatpush2.msra.mxu0 %v52
  %519 = vmatprep.subr.mxu0 0.0
  %520 = vmatpush2.msra.mxu0 %v51
  %521 = vmatprep.subr.mxu0 0.0
  %522 = vmatpush2.msra.mxu0 %v50
  %523 = vmatprep.subr.mxu0 0.0
  %524 = vmatpush2.msra.mxu0 %v49
  %525 = vmatprep.mubr.f32.mxu0 %v454
  %526 = vmatmul.mubr.f32.gmra.mxu0 %v453
  %v527 = vpop.f32.mrf.mxu0
  %v528 = vadd.f32 0.0, %v527
  %v529 = vpop.f32.mrf.mxu0
  %530 = vdwg.mxu0
  %531 = vmatprep.subr.mxu0 0.0
  %532 = vmatpush1.msra.mxu0 %v80
  %533 = vmatprep.subr.mxu0 0.0
  %534 = vmatpush1.msra.mxu0 %v79
  %535 = vmatprep.subr.mxu0 0.0
  %536 = vmatpush1.msra.mxu0 %v78
  %537 = vmatprep.subr.mxu0 0.0
  %538 = vmatpush1.msra.mxu0 %v77
  %539 = vmatprep.subr.mxu0 0.0
  %540 = vmatpush1.msra.mxu0 %v76
  %541 = vmatprep.subr.mxu0 0.0
  %542 = vmatpush1.msra.mxu0 %v75
  %543 = vmatprep.subr.mxu0 0.0
  %544 = vmatpush1.msra.mxu0 %v74
  %545 = vmatprep.subr.mxu0 0.0
  %546 = vmatpush1.msra.mxu0 %v73
  %547 = vmatprep.subr.mxu0 0.0
  %548 = vmatpush1.msra.mxu0 %v72
  %549 = vmatprep.subr.mxu0 0.0
  %550 = vmatpush1.msra.mxu0 %v71
  %551 = vmatprep.subr.mxu0 0.0
  %552 = vmatpush1.msra.mxu0 %v70
  %553 = vmatprep.subr.mxu0 0.0
  %554 = vmatpush1.msra.mxu0 %v69
  %555 = vmatprep.subr.mxu0 0.0
  %556 = vmatpush1.msra.mxu0 %v68
  %557 = vmatprep.subr.mxu0 0.0
  %558 = vmatpush1.msra.mxu0 %v67
  %559 = vmatprep.subr.mxu0 0.0
  %560 = vmatpush1.msra.mxu0 %v66
  %561 = vmatprep.subr.mxu0 0.0
  %562 = vmatpush1.msra.mxu0 %v65
  %563 = vmatprep.subr.mxu0 0.0
  %564 = vmatpush2.msra.mxu0 %v96
  %565 = vmatprep.subr.mxu0 0.0
  %566 = vmatpush2.msra.mxu0 %v95
  %567 = vmatprep.subr.mxu0 0.0
  %568 = vmatpush2.msra.mxu0 %v94
  %569 = vmatprep.subr.mxu0 0.0
  %570 = vmatpush2.msra.mxu0 %v93
  %571 = vmatprep.subr.mxu0 0.0
  %572 = vmatpush2.msra.mxu0 %v92
  %573 = vmatprep.subr.mxu0 0.0
  %574 = vmatpush2.msra.mxu0 %v91
  %575 = vmatprep.subr.mxu0 0.0
  %576 = vmatpush2.msra.mxu0 %v90
  %577 = vmatprep.subr.mxu0 0.0
  %578 = vmatpush2.msra.mxu0 %v89
  %579 = vmatprep.subr.mxu0 0.0
  %580 = vmatpush2.msra.mxu0 %v88
  %581 = vmatprep.subr.mxu0 0.0
  %582 = vmatpush2.msra.mxu0 %v87
  %583 = vmatprep.subr.mxu0 0.0
  %584 = vmatpush2.msra.mxu0 %v86
  %585 = vmatprep.subr.mxu0 0.0
  %586 = vmatpush2.msra.mxu0 %v85
  %587 = vmatprep.subr.mxu0 0.0
  %588 = vmatpush2.msra.mxu0 %v84
  %589 = vmatprep.subr.mxu0 0.0
  %590 = vmatpush2.msra.mxu0 %v83
  %591 = vmatprep.subr.mxu0 0.0
  %592 = vmatpush2.msra.mxu0 %v82
  %593 = vmatprep.subr.mxu0 0.0
  %594 = vmatpush2.msra.mxu0 %v81
  %595 = vmatprep.mubr.f32.mxu0 %v456
  %596 = vmatmul.mubr.f32.gmra.mxu0 %v455
  %v597 = vpop.f32.mrf.mxu0
  %v598 = vadd.f32 %v528, %v597
  %v599 = vpop.f32.mrf.mxu0
  %600 = vdwg.mxu0
  %601 = vmatprep.subr.mxu0 0.0
  %602 = vmatpush1.msra.mxu0 %v112
  %603 = vmatprep.subr.mxu0 0.0
  %604 = vmatpush1.msra.mxu0 %v111
  %605 = vmatprep.subr.mxu0 0.0
  %606 = vmatpush1.msra.mxu0 %v110
  %607 = vmatprep.subr.mxu0 0.0
  %608 = vmatpush1.msra.mxu0 %v109
  %609 = vmatprep.subr.mxu0 0.0
  %610 = vmatpush1.msra.mxu0 %v108
  %611 = vmatprep.subr.mxu0 0.0
  %612 = vmatpush1.msra.mxu0 %v107
  %613 = vmatprep.subr.mxu0 0.0
  %614 = vmatpush1.msra.mxu0 %v106
  %615 = vmatprep.subr.mxu0 0.0
  %616 = vmatpush1.msra.mxu0 %v105
  %617 = vmatprep.subr.mxu0 0.0
  %618 = vmatpush1.msra.mxu0 %v104
  %619 = vmatprep.subr.mxu0 0.0
  %620 = vmatpush1.msra.mxu0 %v103
  %621 = vmatprep.subr.mxu0 0.0
  %622 = vmatpush1.msra.mxu0 %v102
  %623 = vmatprep.subr.mxu0 0.0
  %624 = vmatpush1.msra.mxu0 %v101
  %625 = vmatprep.subr.mxu0 0.0
  %626 = vmatpush1.msra.mxu0 %v100
  %627 = vmatprep.subr.mxu0 0.0
  %628 = vmatpush1.msra.mxu0 %v99
  %629 = vmatprep.subr.mxu0 0.0
  %630 = vmatpush1.msra.mxu0 %v98
  %631 = vmatprep.subr.mxu0 0.0
  %632 = vmatpush1.msra.mxu0 %v97
  %633 = vmatprep.subr.mxu0 0.0
  %634 = vmatpush2.msra.mxu0 %v128
  %635 = vmatprep.subr.mxu0 0.0
  %636 = vmatpush2.msra.mxu0 %v127
  %637 = vmatprep.subr.mxu0 0.0
  %638 = vmatpush2.msra.mxu0 %v126
  %639 = vmatprep.subr.mxu0 0.0
  %640 = vmatpush2.msra.mxu0 %v125
  %641 = vmatprep.subr.mxu0 0.0
  %642 = vmatpush2.msra.mxu0 %v124
  %643 = vmatprep.subr.mxu0 0.0
  %644 = vmatpush2.msra.mxu0 %v123
  %645 = vmatprep.subr.mxu0 0.0
  %646 = vmatpush2.msra.mxu0 %v122
  %647 = vmatprep.subr.mxu0 0.0
  %648 = vmatpush2.msra.mxu0 %v121
  %649 = vmatprep.subr.mxu0 0.0
  %650 = vmatpush2.msra.mxu0 %v120
  %651 = vmatprep.subr.mxu0 0.0
  %652 = vmatpush2.msra.mxu0 %v119
  %653 = vmatprep.subr.mxu0 0.0
  %654 = vmatpush2.msra.mxu0 %v118
  %655 = vmatprep.subr.mxu0 0.0
  %656 = vmatpush2.msra.mxu0 %v117
  %657 = vmatprep.subr.mxu0 0.0
  %658 = vmatpush2.msra.mxu0 %v116
  %659 = vmatprep.subr.mxu0 0.0
  %660 = vmatpush2.msra.mxu0 %v115
  %661 = vmatprep.subr.mxu0 0.0
  %662 = vmatpush2.msra.mxu0 %v114
  %663 = vmatprep.subr.mxu0 0.0
  %664 = vmatpush2.msra.mxu0 %v113
  %665 = vmatprep.mubr.f32.mxu0 %v458
  %666 = vmatmul.mubr.f32.gmra.mxu0 %v457
  %v667 = vpop.f32.mrf.mxu0
  %v668 = vadd.f32 %v598, %v667
  %v669 = vpop.f32.mrf.mxu0
  %670 = vdwg.mxu0
  %671 = vmatprep.subr.mxu0 0.0
  %672 = vmatpush1.msra.mxu0 %v144
  %673 = vmatprep.subr.mxu0 0.0
  %674 = vmatpush1.msra.mxu0 %v143
  %675 = vmatprep.subr.mxu0 0.0
  %676 = vmatpush1.msra.mxu0 %v142
  %677 = vmatprep.subr.mxu0 0.0
  %678 = vmatpush1.msra.mxu0 %v141
  %679 = vmatprep.subr.mxu0 0.0
  %680 = vmatpush1.msra.mxu0 %v140
  %681 = vmatprep.subr.mxu0 0.0
  %682 = vmatpush1.msra.mxu0 %v139
  %683 = vmatprep.subr.mxu0 0.0
  %684 = vmatpush1.msra.mxu0 %v138
  %685 = vmatprep.subr.mxu0 0.0
  %686 = vmatpush1.msra.mxu0 %v137
  %687 = vmatprep.subr.mxu0 0.0
  %688 = vmatpush1.msra.mxu0 %v136
  %689 = vmatprep.subr.mxu0 0.0
  %690 = vmatpush1.msra.mxu0 %v135
  %691 = vmatprep.subr.mxu0 0.0
  %692 = vmatpush1.msra.mxu0 %v134
  %693 = vmatprep.subr.mxu0 0.0
  %694 = vmatpush1.msra.mxu0 %v133
  %695 = vmatprep.subr.mxu0 0.0
  %696 = vmatpush1.msra.mxu0 %v132
  %697 = vmatprep.subr.mxu0 0.0
  %698 = vmatpush1.msra.mxu0 %v131
  %699 = vmatprep.subr.mxu0 0.0
  %700 = vmatpush1.msra.mxu0 %v130
  %701 = vmatprep.subr.mxu0 0.0
  %702 = vmatpush1.msra.mxu0 %v129
  %703 = vmatprep.subr.mxu0 0.0
  %704 = vmatpush2.msra.mxu0 %v160
  %705 = vmatprep.subr.mxu0 0.0
  %706 = vmatpush2.msra.mxu0 %v159
  %707 = vmatprep.subr.mxu0 0.0
  %708 = vmatpush2.msra.mxu0 %v158
  %709 = vmatprep.subr.mxu0 0.0
  %710 = vmatpush2.msra.mxu0 %v157
  %711 = vmatprep.subr.mxu0 0.0
  %712 = vmatpush2.msra.mxu0 %v156
  %713 = vmatprep.subr.mxu0 0.0
  %714 = vmatpush2.msra.mxu0 %v155
  %715 = vmatprep.subr.mxu0 0.0
  %716 = vmatpush2.msra.mxu0 %v154
  %717 = vmatprep.subr.mxu0 0.0
  %718 = vmatpush2.msra.mxu0 %v153
  %719 = vmatprep.subr.mxu0 0.0
  %720 = vmatpush2.msra.mxu0 %v152
  %721 = vmatprep.subr.mxu0 0.0
  %722 = vmatpush2.msra.mxu0 %v151
  %723 = vmatprep.subr.mxu0 0.0
  %724 = vmatpush2.msra.mxu0 %v150
  %725 = vmatprep.subr.mxu0 0.0
  %726 = vmatpush2.msra.mxu0 %v149
  %727 = vmatprep.subr.mxu0 0.0
  %728 = vmatpush2.msra.mxu0 %v148
  %729 = vmatprep.subr.mxu0 0.0
  %730 = vmatpush2.msra.mxu0 %v147
  %731 = vmatprep.subr.mxu0 0.0
  %732 = vmatpush2.msra.mxu0 %v146
  %733 = vmatprep.subr.mxu0 0.0
  %734 = vmatpush2.msra.mxu0 %v145
  %735 = vmatprep.mubr.f32.mxu0 %v460
  %736 = vmatmul.mubr.f32.gmra.mxu0 %v459
  %v737 = vpop.f32.mrf.mxu0
  %v738 = vadd.f32 %v668, %v737
  %v739 = vpop.f32.mrf.mxu0
  %740 = vdwg.mxu0
  %v741 = vadd.f32 %v452, %v738
  %742 = vst [vmem:[#allocation2 + $0x8] sm:$0xff] %v741
  // Predicated region
  $region26: #{trades_loss.1} parent=0 // pred_check
    %p743 = pneg %p20
  $region27: #{trades_loss.1} parent=0 // pred_check_branch
    %745 = sbr.rel (%p743) target = $region29
  $region28: #{trades_loss.1} parent=0 // pred_region
    %v746 = vld [vmem:[#allocation2] sm:$0xff]
    %v747 = vld [vmem:[#allocation2 + $0x8] sm:$0xff]
    %v748 = vlaneseq
    %v749 = vand.u32 %v748, 127
    %vm750 = vcmp.lt.s32.totalorder %v749, 10
    %v751 = vsel %vm750, %v746, -1e+30
    %v752 = vsel %vm750, %v747, -1e+30
    %753 = vmax.xlane.f32.xlu0 %v751
    %v754 = vpop.xlane.xlu0 %753
    %v755 = vsub.f32 %v751, %v754
    %v756 = vmul.f32 %v755, 1.442695
    %v757 = vpow.pop %v756
    %758 = vadd.xlane.f32.xlu0 %v757
    %v759 = vpop.xlane.xlu0 %758
    %v760 = vlog2.pop %v759
    %v761 = vmul.f32 %v760, 0.6931472
    %v762 = vsub.f32 %v755, %v761
    %v763 = vrcp.pop %v759
    %v764 = vmul.f32 %v757, %v763
    %765 = vmax.xlane.f32.xlu0 %v752
    %v766 = vpop.xlane.xlu0 %765
    %v767 = vsub.f32 %v752, %v766
    %v768 = vmul.f32 %v767, 1.442695
    %v769 = vpow.pop %v768
    %770 = vadd.xlane.f32.xlu0 %v769
    %v771 = vpop.xlane.xlu0 %770
    %v772 = vlog2.pop %v771
    %v773 = vmul.f32 %v772, 0.6931472
    %v774 = vsub.f32 %v767, %v773
    %v775 = vld [vmem:[%s4] sm:$0xff]
    %vm776 = vcmp.ge.s32.totalorder %v775, 0
    %v777 = vsel %vm776, 1, 0
    %v778 = vcvt.s32.f32 %v777
    %779 = vset.pattern.permute.xlu0 0
    %780 = vperm.xlu0 %779, %v775
    %v781 = vpop.permute.xlu0 %780
    %vm782 = vcmp.eq.s32.totalorder %v749, %v781
    %v783 = vsel %vm782, 1, 0
    %v784 = vcvt.s32.f32 %v783
    %v785 = vsel %vm750, 1, 0
    %v786 = vcvt.s32.f32 %v785
    %v787 = vmul.f32 %v784, %v762
    %789 = vset.pattern.permute.xlu0 0
    %790 = vperm.xlu0 %789, %v778
    %v791 = vpop.permute.xlu0 %790
    %v793 = vmul.f32 %v787, %v791
    %794 = vadd.xlane.f32.xlu0 %v793
    %v795 = vpop.xlane.xlu0 %794
    %v796 = vrot.slane %v795, 4
    %v797 = vadd.f32 %v795, %v796
    %v798 = vrot.slane %v797, 2
    %v799 = vadd.f32 %v797, %v798
    %v800 = vrot.slane %v799, 1
    %v801 = vadd.f32 %v799, %v800
    %s802 = vtos %v801
    %s803 = ssub.f32 0.0, %s802
    %v804 = vsub.f32 %v762, %v774
    %v805 = vmul.f32 %v764, %v804
    %v806 = vmul.f32 %v805, %v786
    %v807 = vmul.f32 %v806, %v791
    %808 = vadd.xlane.f32.xlu0 %v807
    %v809 = vpop.xlane.xlu0 %808
    %v810 = vrot.slane %v809, 4
    %v811 = vadd.f32 %v809, %v810
    %v812 = vrot.slane %v811, 2
    %v813 = vadd.f32 %v811, %v812
    %v814 = vrot.slane %v813, 1
    %v815 = vadd.f32 %v813, %v814
    %s816 = vtos %v815
    %s817 = sadd.f32 %s803, %s816
    %v818 = vstv %s817
    %819 = vst [vmem:[%s5] sm:$0xff] %v818
  $region29: #{trades_loss.1} parent=0 // pred_fallthru
    _
  // Predicated region
  $region30: #{trades_loss.1} parent=0 // pred_check
    _
  $region31: #{trades_loss.1} parent=0 // pred_check_branch
    %821 = sbr.rel (0) target = $region33
  $region32: #{trades_loss.1} parent=0 // pred_region
    _
  $region33: #{trades_loss.1} parent=0 // pred_fallthru
    _
  // Predicated region
  $region34: #{trades_loss.1} parent=0 // pred_check
    _
  $region35: #{trades_loss.1} parent=0 // pred_check_branch
    %823 = sbr.rel (0) target = $region37
  $region36: #{trades_loss.1} parent=0 // pred_region
    _
  $region37: #{trades_loss.1} parent=0 // pred_fallthru
    _

</llo_original>
